<compile_context>
chip_gen: v7x
topology: tpu7x:2x2x1
jax: 0.10.0
libtpu: 0.0.40
codegen_flags: <defaults>
</compile_context>

<pallas_src>
import functools

import jax
import jax.numpy as jnp
from jax import lax
from jax.experimental import pallas as pl
from jax.experimental.pallas import tpu as pltpu

_SUBLANE = 8  # f32 sublane tile


# ----------------------------- Pallas kernel --------------------------------

def _first_octave_kernel(x_ref, wh_ref, wl_ref, sh_ref, sl_ref,
                         oh_ref, ol_ref, *, H, W, P):
    # x_ref : (1, Cpad, H*W + 2P)  lane-flattened NCHW input, zero-padded by P
    #                              lanes on each side (channels on sublanes).
    # wh_ref: (c_h, 9*Cpad)        h2h im2col weights, BN scale folded in.
    # wl_ref: (c_l, 9*Cpad)        h2l im2col weights, BN scale * 0.25 folded in.
    # sh/sl : (c, 1)               folded eval-mode BN shifts.
    # oh_ref: (1, c_h, H*W)        h2h output, lane j = y*W + x  (dense NCHW).
    # ol_ref: (1, c_l, H*W)        h2l output, valid at lanes j = 2*yy*W + 2*xx.
    HW = H * W
    xp = x_ref[0]                                            # (Cpad, HW + 2P)

    # Per-lane output column index; hoisted once and reused by every masked tap.
    col = lax.broadcasted_iota(jnp.int32, (1, HW), 1) % W
    hi_mask = {-1: col >= 1, 0: None, 1: col < W - 1}        # full-res conv
    lo_mask = {-1: col >= 2, 0: None, 1: col < W - 2}        # half-res conv

    def conv_branch(tap, masks, w_ref, s_ref, o_ref):
        taps = []
        for dy in (-1, 0, 1):
            for dx in (-1, 0, 1):
                t = tap(dy, dx)
                if masks[dx] is not None:                    # horizontal wrap
                    t = jnp.where(masks[dx], t, 0.0)
                taps.append(t)
        patches = jnp.concatenate(taps, axis=0)              # (9*Cpad, HW)
        y = jnp.dot(w_ref[...], patches,                     # one K=9*Cpad matmul
                    preferred_element_type=jnp.float32)
        y = y + s_ref[...]                                   # folded BN shift
        o_ref[0] = jnp.maximum(y, 0.0).astype(o_ref.dtype)   # ReLU

    # --- h2h: 3x3 conv, pad 1, full resolution.  Out-of-image rows fall into
    #     the zero lane-padding; only column wrap between rows needs masking.
    conv_branch(lambda dy, dx: xp[:, P + dy * W + dx:
                                  P + dy * W + dx + HW],
                hi_mask, wh_ref, sh_ref, oh_ref)

    # --- h2l: 2x2 avg-pool (0.25 folded into wl) then 3x3 conv, pad 1.
    #     s[p] = sum of the 2x2 block anchored at pixel p; pooled values live at
    #     even-row/even-col lanes, so the conv taps are windows shifted by
    #     2*dy*W + 2*dx.  Output is produced at the same stride-2 lanes; the
    #     wrapper slices out the valid quarter.
    S = HW + 4 * W + 4
    b0 = P - 2 * W - 2
    s = (xp[:, b0:b0 + S] + xp[:, b0 + 1:b0 + 1 + S]
         + xp[:, b0 + W:b0 + W + S] + xp[:, b0 + W + 1:b0 + W + 1 + S])
    conv_branch(lambda dy, dx: s[:, 2 * (dy + 1) * W + 2 * (dx + 1):
                                 2 * (dy + 1) * W + 2 * (dx + 1) + HW],
                lo_mask, wl_ref, sl_ref, ol_ref)


# ------------------------------ JAX wrapper ----------------------------------

def first_octave_cbr(x_nchw, params):
    """FirstOctaveCBR.forward (stride=1, 3x3, pad 1, bias=False, eval-mode BN).
    Returns (x_h, x_l) in NCHW."""
    N, cin, H, W = x_nchw.shape
    assert H % 2 == 0 and W % 2 == 0  # TODO(synk): odd H/W (AvgPool2d floor) not supported
    c_h = params["w_h2h"].shape[0]
    c_l = params["w_h2l"].shape[0]
    HW = H * W
    P = 3 * W + 8                       # lane zero-pad; covers all tap windows
    L = HW + 2 * P
    cpad = max(_SUBLANE, ((cin + _SUBLANE - 1) // _SUBLANE) * _SUBLANE)

    # channels -> sublanes (padded to the f32 tile), flattened spatial -> lanes,
    # with P zero lanes on each side (pure layout plumbing, stays in XLA).
    x_flat = x_nchw.reshape(N, cin, HW)
    x_flat = jnp.pad(x_flat, ((0, 0), (0, cpad - cin), (P, P)))

    def prep_weight(w_oihw, scale):
        cout = w_oihw.shape[0]
        wk = jnp.transpose(w_oihw, (0, 2, 3, 1))               # (Cout, 3, 3, Cin)
        wk = jnp.pad(wk, ((0, 0), (0, 0), (0, 0), (0, cpad - cin)))
        wk = wk.reshape(cout, 9 * cpad)                        # tap-major, chan-minor
        return (wk * scale[:, None]).astype(jnp.float32)       # fold BN scale

    wh = prep_weight(params["w_h2h"], params["scale_h"])
    wl = prep_weight(params["w_h2l"], params["scale_l"] * 0.25)  # fold avg-pool 1/4
    sh = params["shift_h"].reshape(c_h, 1).astype(jnp.float32)
    sl = params["shift_l"].reshape(c_l, 1).astype(jnp.float32)

    kernel = functools.partial(_first_octave_kernel, H=H, W=W, P=P)

    # TODO(synk): at realistic sizes (H*W >= 128^2, Cout >= 64) tile the spatial
    # axis (blocks of rows with a 1-row halo) as a second "parallel" grid axis
    # and cast matmul operands to bf16; whole-image blocks are only right at toy size.
    oh, ol = pl.pallas_call(
        kernel,
        out_shape=(jax.ShapeDtypeStruct((N, c_h, HW), x_nchw.dtype),
                   jax.ShapeDtypeStruct((N, c_l, HW), x_nchw.dtype)),
        grid=(N,),
        in_specs=[
            pl.BlockSpec((1, cpad, L), lambda n: (n, 0, 0)),
            pl.BlockSpec((c_h, 9 * cpad), lambda n: (0, 0)),
            pl.BlockSpec((c_l, 9 * cpad), lambda n: (0, 0)),
            pl.BlockSpec((c_h, 1), lambda n: (0, 0)),
            pl.BlockSpec((c_l, 1), lambda n: (0, 0)),
        ],
        out_specs=(pl.BlockSpec((1, c_h, HW), lambda n: (n, 0, 0)),
                   pl.BlockSpec((1, c_l, HW), lambda n: (n, 0, 0))),
        compiler_params=pltpu.CompilerParams(dimension_semantics=("parallel",)),
    )(x_flat, wh, wl, sh, sl)

    # h2h is already dense NCHW; h2l valid values sit at even rows / even cols.
    x_h = oh.reshape(N, c_h, H, W)
    x_l = ol.reshape(N, c_l, H, W)[:, :, ::2, ::2]
    return x_h, x_l


# ------------------------------ reference (plain JAX) ------------------------

def _ref_forward(x_nchw, p, eps):
    def conv(x, w):
        return lax.conv_general_dilated(
            x, w, window_strides=(1, 1), padding=((1, 1), (1, 1)),
            dimension_numbers=("NCHW", "OIHW", "NCHW"))

    def pool(x):
        N, C, H, W = x.shape
        return x.reshape(N, C, H // 2, 2, W // 2, 2).mean(axis=(3, 5))

    def bn_relu(x, gamma, beta, mean, var):
        y = (x - mean[None, :, None, None]) / jnp.sqrt(var[None, :, None, None] + eps)
        y = y * gamma[None, :, None, None] + beta[None, :, None, None]
        return jnp.maximum(y, 0.0)

    xh = bn_relu(conv(x_nchw, p["w_h2h"]), p["gamma_h"], p["beta_h"], p["mean_h"], p["var_h"])
    xl = bn_relu(conv(pool(x_nchw), p["w_h2l"]), p["gamma_l"], p["beta_l"], p["mean_l"], p["var_l"])
    return xh, xl


# ------------------------------ main ------------------------------------------

if __name__ == "__main__":
    # module config: in_channels=4, out_channels=8, alpha=0.5, kernel 3x3, stride=1
    in_channels, out_channels, alpha = 4, 8, 0.5
    c_l = int(alpha * out_channels)            # 4  (h2l / bn_l channels)
    c_h = out_channels - c_l                   # 4  (h2h / bn_h channels)
    N, H, W = 2, 16, 16
    eps = 1e-5

    key = jax.random.PRNGKey(0)
    kx, kw1, kw2 = jax.random.split(key, 3)
    x = jax.random.normal(kx, (N, in_channels, H, W), dtype=jnp.float32)

    # deterministic parameter init (Conv2d weights OIHW, bias=False; BN eval stats)
    w_h2h = 0.1 * jax.random.normal(kw1, (c_h, in_channels, 3, 3), dtype=jnp.float32)
    w_h2l = 0.1 * jax.random.normal(kw2, (c_l, in_channels, 3, 3), dtype=jnp.float32)
    gamma_h = 1.0 + 0.1 * jnp.arange(c_h, dtype=jnp.float32)
    beta_h = 0.05 * jnp.arange(c_h, dtype=jnp.float32) - 0.1
    mean_h = 0.02 * jnp.arange(c_h, dtype=jnp.float32)
    var_h = 1.0 + 0.03 * jnp.arange(c_h, dtype=jnp.float32)
    gamma_l = 1.0 - 0.05 * jnp.arange(c_l, dtype=jnp.float32)
    beta_l = 0.03 * jnp.arange(c_l, dtype=jnp.float32)
    mean_l = -0.01 * jnp.arange(c_l, dtype=jnp.float32)
    var_l = 1.0 + 0.02 * jnp.arange(c_l, dtype=jnp.float32)

    # fold eval-mode BN into per-channel scale/shift
    # TODO(synk): training-mode BatchNorm (batch statistics / running-stat update) not implemented.
    scale_h = gamma_h / jnp.sqrt(var_h + eps)
    shift_h = beta_h - mean_h * scale_h
    scale_l = gamma_l / jnp.sqrt(var_l + eps)
    shift_l = beta_l - mean_l * scale_l

    params = dict(w_h2h=w_h2h, w_h2l=w_h2l,
                  scale_h=scale_h, shift_h=shift_h,
                  scale_l=scale_l, shift_l=shift_l,
                  gamma_h=gamma_h, beta_h=beta_h, mean_h=mean_h, var_h=var_h,
                  gamma_l=gamma_l, beta_l=beta_l, mean_l=mean_l, var_l=var_l)

    x_h, x_l = jax.jit(first_octave_cbr)(x, params)
    jax.block_until_ready((x_h, x_l))

    # correctness check against plain-JAX reference of the PyTorch forward
    ref_h, ref_l = _ref_forward(x, params, eps)
    assert x_h.shape == (N, c_h, H, W) and x_l.shape == (N, c_l, H // 2, W // 2)
    assert jnp.allclose(x_h, ref_h, atol=1e-3, rtol=1e-3)
    assert jnp.allclose(x_l, ref_l, atol=1e-3, rtol=1e-3)

    print("KERNEL_OK")
</pallas_src>

<mosaic_0001>
module attributes {stable_mosaic.version = 11 : i64} {
  func.func @_first_octave_kernel(%arg0: i32, %arg1: memref<1x8x368xf32, #tpu.memory_space<vmem>>, %arg2: memref<4x72xf32, #tpu.memory_space<vmem>>, %arg3: memref<4x72xf32, #tpu.memory_space<vmem>>, %arg4: memref<4x1xf32, #tpu.memory_space<vmem>>, %arg5: memref<4x1xf32, #tpu.memory_space<vmem>>, %arg6: memref<1x4x256xf32, #tpu.memory_space<vmem>>, %arg7: memref<1x4x256xf32, #tpu.memory_space<vmem>>) attributes {dimension_semantics = [#tpu.dimension_semantics<parallel>], iteration_bounds = array<i64: 2>, scalar_prefetch = 0 : i64, scratch_operands = 0 : i64, tpu.core_type = #tpu.core_type<tc>, window_params = [{transform_indices = @transform_0, window_bounds = array<i64: 1, 8, 368>}, {pipeline_mode = #tpu.pipeline_mode<synchronous>, transform_indices = @transform_1, window_bounds = array<i64: 4, 72>}, {pipeline_mode = #tpu.pipeline_mode<synchronous>, transform_indices = @transform_2, window_bounds = array<i64: 4, 72>}, {pipeline_mode = #tpu.pipeline_mode<synchronous>, transform_indices = @transform_3, window_bounds = array<i64: 4, 1>}, {pipeline_mode = #tpu.pipeline_mode<synchronous>, transform_indices = @transform_4, window_bounds = array<i64: 4, 1>}, {transform_indices = @transform_5, window_bounds = array<i64: 1, 4, 256>}, {transform_indices = @transform_6, window_bounds = array<i64: 1, 4, 256>}]} {
    %c0 = arith.constant 0 : index
    %c0_0 = arith.constant 0 : index
    %c0_1 = arith.constant 0 : index
    %0 = vector.load %arg1[%c0, %c0_0, %c0_1] : memref<1x8x368xf32, #tpu.memory_space<vmem>>, vector<1x8x368xf32>
    %1 = vector.shape_cast %0 : vector<1x8x368xf32> to vector<8x368xf32>
    %2 = tpu.iota {dimensions = array<i32: 1>} : vector<1x256xi32>
    %c16_i32 = arith.constant 16 : i32
    %c0_i32 = arith.constant 0 : i32
    %3 = arith.cmpi eq, %c16_i32, %c0_i32 : i32
    %c1_i32 = arith.constant 1 : i32
    %4 = arith.select %3, %c1_i32, %c16_i32 : i32
    %5 = vector.broadcast %4 : i32 to vector<1x256xi32>
    %6 = arith.remsi %2, %5 : vector<1x256xi32>
    %c0_i32_2 = arith.constant 0 : i32
    %7 = vector.broadcast %c0_i32_2 : i32 to vector<1x256xi32>
    %8 = arith.cmpi ne, %6, %7 : vector<1x256xi32>
    %c0_i32_3 = arith.constant 0 : i32
    %9 = vector.broadcast %c0_i32_3 : i32 to vector<1x256xi32>
    %10 = arith.cmpi slt, %6, %9 : vector<1x256xi32>
    %c0_i32_4 = arith.constant 0 : i32
    %11 = arith.cmpi slt, %4, %c0_i32_4 : i32
    %12 = vector.broadcast %11 : i1 to vector<1x256xi1>
    %13 = vector.broadcast %12 : vector<1x256xi1> to vector<1x256xi1>
    %14 = arith.xori %10, %13 : vector<1x256xi1>
    %15 = arith.andi %14, %8 : vector<1x256xi1>
    %16 = vector.broadcast %4 : i32 to vector<1x256xi32>
    %17 = arith.addi %6, %16 : vector<1x256xi32>
    %18 = arith.select %15, %17, %6 : vector<1x256xi1>, vector<1x256xi32>
    %c1_i32_5 = arith.constant 1 : i32
    %19 = vector.broadcast %c1_i32_5 : i32 to vector<1x256xi32>
    %20 = arith.cmpi sge, %18, %19 : vector<1x256xi32>
    %c15_i32 = arith.constant 15 : i32
    %21 = vector.broadcast %c15_i32 : i32 to vector<1x256xi32>
    %22 = arith.cmpi slt, %18, %21 : vector<1x256xi32>
    %c2_i32 = arith.constant 2 : i32
    %23 = vector.broadcast %c2_i32 : i32 to vector<1x256xi32>
    %24 = arith.cmpi sge, %18, %23 : vector<1x256xi32>
    %c14_i32 = arith.constant 14 : i32
    %25 = vector.broadcast %c14_i32 : i32 to vector<1x256xi32>
    %26 = arith.cmpi slt, %18, %25 : vector<1x256xi32>
    %27 = vector.extract_strided_slice %1 {offsets = [0, 39], sizes = [8, 256], strides = [1, 1]} : vector<8x368xf32> to vector<8x256xf32>
    %cst = arith.constant 0.000000e+00 : f32
    %28 = vector.shape_cast %20 : vector<1x256xi1> to vector<1x256xi1>
    %29 = vector.broadcast %28 : vector<1x256xi1> to vector<8x256xi1>
    %30 = vector.broadcast %cst : f32 to vector<8x256xf32>
    %31 = arith.select %29, %27, %30 : vector<8x256xi1>, vector<8x256xf32>
    %32 = vector.extract_strided_slice %1 {offsets = [0, 40], sizes = [8, 256], strides = [1, 1]} : vector<8x368xf32> to vector<8x256xf32>
    %33 = vector.extract_strided_slice %1 {offsets = [0, 41], sizes = [8, 256], strides = [1, 1]} : vector<8x368xf32> to vector<8x256xf32>
    %cst_6 = arith.constant 0.000000e+00 : f32
    %34 = vector.shape_cast %22 : vector<1x256xi1> to vector<1x256xi1>
    %35 = vector.broadcast %34 : vector<1x256xi1> to vector<8x256xi1>
    %36 = vector.broadcast %cst_6 : f32 to vector<8x256xf32>
    %37 = arith.select %35, %33, %36 : vector<8x256xi1>, vector<8x256xf32>
    %38 = vector.extract_strided_slice %1 {offsets = [0, 55], sizes = [8, 256], strides = [1, 1]} : vector<8x368xf32> to vector<8x256xf32>
    %cst_7 = arith.constant 0.000000e+00 : f32
    %39 = vector.shape_cast %20 : vector<1x256xi1> to vector<1x256xi1>
    %40 = vector.broadcast %39 : vector<1x256xi1> to vector<8x256xi1>
    %41 = vector.broadcast %cst_7 : f32 to vector<8x256xf32>
    %42 = arith.select %40, %38, %41 : vector<8x256xi1>, vector<8x256xf32>
    %43 = vector.extract_strided_slice %1 {offsets = [0, 56], sizes = [8, 256], strides = [1, 1]} : vector<8x368xf32> to vector<8x256xf32>
    %44 = vector.extract_strided_slice %1 {offsets = [0, 57], sizes = [8, 256], strides = [1, 1]} : vector<8x368xf32> to vector<8x256xf32>
    %cst_8 = arith.constant 0.000000e+00 : f32
    %45 = vector.shape_cast %22 : vector<1x256xi1> to vector<1x256xi1>
    %46 = vector.broadcast %45 : vector<1x256xi1> to vector<8x256xi1>
    %47 = vector.broadcast %cst_8 : f32 to vector<8x256xf32>
    %48 = arith.select %46, %44, %47 : vector<8x256xi1>, vector<8x256xf32>
    %49 = vector.extract_strided_slice %1 {offsets = [0, 71], sizes = [8, 256], strides = [1, 1]} : vector<8x368xf32> to vector<8x256xf32>
    %cst_9 = arith.constant 0.000000e+00 : f32
    %50 = vector.shape_cast %20 : vector<1x256xi1> to vector<1x256xi1>
    %51 = vector.broadcast %50 : vector<1x256xi1> to vector<8x256xi1>
    %52 = vector.broadcast %cst_9 : f32 to vector<8x256xf32>
    %53 = arith.select %51, %49, %52 : vector<8x256xi1>, vector<8x256xf32>
    %54 = vector.extract_strided_slice %1 {offsets = [0, 72], sizes = [8, 256], strides = [1, 1]} : vector<8x368xf32> to vector<8x256xf32>
    %55 = vector.extract_strided_slice %1 {offsets = [0, 73], sizes = [8, 256], strides = [1, 1]} : vector<8x368xf32> to vector<8x256xf32>
    %cst_10 = arith.constant 0.000000e+00 : f32
    %56 = vector.shape_cast %22 : vector<1x256xi1> to vector<1x256xi1>
    %57 = vector.broadcast %56 : vector<1x256xi1> to vector<8x256xi1>
    %58 = vector.broadcast %cst_10 : f32 to vector<8x256xf32>
    %59 = arith.select %57, %55, %58 : vector<8x256xi1>, vector<8x256xf32>
    %60 = tpu.concatenate %31, %32, %37, %42, %43, %48, %53, %54, %59 in 0 : vector<8x256xf32>, vector<8x256xf32>, vector<8x256xf32>, vector<8x256xf32>, vector<8x256xf32>, vector<8x256xf32>, vector<8x256xf32>, vector<8x256xf32>, vector<8x256xf32> -> vector<72x256xf32>
    %c0_11 = arith.constant 0 : index
    %c0_12 = arith.constant 0 : index
    %61 = vector.load %arg2[%c0_11, %c0_12] : memref<4x72xf32, #tpu.memory_space<vmem>>, vector<4x72xf32>
    %cst_13 = arith.constant dense<0.000000e+00> : vector<4x256xf32>
    %62 = tpu.matmul %61, %60, %cst_13 {dimension_numbers = #tpu.dot_dimension_numbers<[1], [0], [0], [1], [0, 0, 1, 1], [], []>} : vector<4x72xf32>, vector<72x256xf32>, vector<4x256xf32> -> vector<4x256xf32>
    %c0_14 = arith.constant 0 : index
    %c0_15 = arith.constant 0 : index
    %63 = vector.load %arg4[%c0_14, %c0_15] : memref<4x1xf32, #tpu.memory_space<vmem>>, vector<4x1xf32>
    %64 = vector.broadcast %63 : vector<4x1xf32> to vector<4x256xf32>
    %65 = arith.addf %62, %64 : vector<4x256xf32>
    %cst_16 = arith.constant 0.000000e+00 : f32
    %66 = vector.broadcast %cst_16 : f32 to vector<4x256xf32>
    %67 = arith.maximumf %65, %66 : vector<4x256xf32>
    %c0_17 = arith.constant 0 : index
    %c0_18 = arith.constant 0 : index
    %c0_19 = arith.constant 0 : index
    %68 = vector.load %arg6[%c0_17, %c0_18, %c0_19] : memref<1x4x256xf32, #tpu.memory_space<vmem>>, vector<1x4x256xf32>
    %69 = vector.shape_cast %68 : vector<1x4x256xf32> to vector<4x256xf32>
    %70 = vector.shape_cast %67 : vector<4x256xf32> to vector<1x4x256xf32>
    tpu.vector_store %arg6[%c0_17, %c0_18, %c0_19], %70 {strides = array<i32>} : memref<1x4x256xf32, #tpu.memory_space<vmem>>, vector<1x4x256xf32>,
    %71 = vector.extract_strided_slice %1 {offsets = [0, 22], sizes = [8, 324], strides = [1, 1]} : vector<8x368xf32> to vector<8x324xf32>
    %72 = vector.extract_strided_slice %1 {offsets = [0, 23], sizes = [8, 324], strides = [1, 1]} : vector<8x368xf32> to vector<8x324xf32>
    %73 = arith.addf %71, %72 : vector<8x324xf32>
    %74 = vector.extract_strided_slice %1 {offsets = [0, 38], sizes = [8, 324], strides = [1, 1]} : vector<8x368xf32> to vector<8x324xf32>
    %75 = arith.addf %73, %74 : vector<8x324xf32>
    %76 = vector.extract_strided_slice %1 {offsets = [0, 39], sizes = [8, 324], strides = [1, 1]} : vector<8x368xf32> to vector<8x324xf32>
    %77 = arith.addf %75, %76 : vector<8x324xf32>
    %78 = vector.extract_strided_slice %77 {offsets = [0, 0], sizes = [8, 256], strides = [1, 1]} : vector<8x324xf32> to vector<8x256xf32>
    %cst_20 = arith.constant 0.000000e+00 : f32
    %79 = vector.shape_cast %24 : vector<1x256xi1> to vector<1x256xi1>
    %80 = vector.broadcast %79 : vector<1x256xi1> to vector<8x256xi1>
    %81 = vector.broadcast %cst_20 : f32 to vector<8x256xf32>
    %82 = arith.select %80, %78, %81 : vector<8x256xi1>, vector<8x256xf32>
    %83 = vector.extract_strided_slice %77 {offsets = [0, 2], sizes = [8, 256], strides = [1, 1]} : vector<8x324xf32> to vector<8x256xf32>
    %84 = vector.extract_strided_slice %77 {offsets = [0, 4], sizes = [8, 256], strides = [1, 1]} : vector<8x324xf32> to vector<8x256xf32>
    %cst_21 = arith.constant 0.000000e+00 : f32
    %85 = vector.shape_cast %26 : vector<1x256xi1> to vector<1x256xi1>
    %86 = vector.broadcast %85 : vector<1x256xi1> to vector<8x256xi1>
    %87 = vector.broadcast %cst_21 : f32 to vector<8x256xf32>
    %88 = arith.select %86, %84, %87 : vector<8x256xi1>, vector<8x256xf32>
    %89 = vector.extract_strided_slice %77 {offsets = [0, 32], sizes = [8, 256], strides = [1, 1]} : vector<8x324xf32> to vector<8x256xf32>
    %cst_22 = arith.constant 0.000000e+00 : f32
    %90 = vector.shape_cast %24 : vector<1x256xi1> to vector<1x256xi1>
    %91 = vector.broadcast %90 : vector<1x256xi1> to vector<8x256xi1>
    %92 = vector.broadcast %cst_22 : f32 to vector<8x256xf32>
    %93 = arith.select %91, %89, %92 : vector<8x256xi1>, vector<8x256xf32>
    %94 = vector.extract_strided_slice %77 {offsets = [0, 34], sizes = [8, 256], strides = [1, 1]} : vector<8x324xf32> to vector<8x256xf32>
    %95 = vector.extract_strided_slice %77 {offsets = [0, 36], sizes = [8, 256], strides = [1, 1]} : vector<8x324xf32> to vector<8x256xf32>
    %cst_23 = arith.constant 0.000000e+00 : f32
    %96 = vector.shape_cast %26 : vector<1x256xi1> to vector<1x256xi1>
    %97 = vector.broadcast %96 : vector<1x256xi1> to vector<8x256xi1>
    %98 = vector.broadcast %cst_23 : f32 to vector<8x256xf32>
    %99 = arith.select %97, %95, %98 : vector<8x256xi1>, vector<8x256xf32>
    %100 = vector.extract_strided_slice %77 {offsets = [0, 64], sizes = [8, 256], strides = [1, 1]} : vector<8x324xf32> to vector<8x256xf32>
    %cst_24 = arith.constant 0.000000e+00 : f32
    %101 = vector.shape_cast %24 : vector<1x256xi1> to vector<1x256xi1>
    %102 = vector.broadcast %101 : vector<1x256xi1> to vector<8x256xi1>
    %103 = vector.broadcast %cst_24 : f32 to vector<8x256xf32>
    %104 = arith.select %102, %100, %103 : vector<8x256xi1>, vector<8x256xf32>
    %105 = vector.extract_strided_slice %77 {offsets = [0, 66], sizes = [8, 256], strides = [1, 1]} : vector<8x324xf32> to vector<8x256xf32>
    %106 = vector.extract_strided_slice %77 {offsets = [0, 68], sizes = [8, 256], strides = [1, 1]} : vector<8x324xf32> to vector<8x256xf32>
    %cst_25 = arith.constant 0.000000e+00 : f32
    %107 = vector.shape_cast %26 : vector<1x256xi1> to vector<1x256xi1>
    %108 = vector.broadcast %107 : vector<1x256xi1> to vector<8x256xi1>
    %109 = vector.broadcast %cst_25 : f32 to vector<8x256xf32>
    %110 = arith.select %108, %106, %109 : vector<8x256xi1>, vector<8x256xf32>
    %111 = tpu.concatenate %82, %83, %88, %93, %94, %99, %104, %105, %110 in 0 : vector<8x256xf32>, vector<8x256xf32>, vector<8x256xf32>, vector<8x256xf32>, vector<8x256xf32>, vector<8x256xf32>, vector<8x256xf32>, vector<8x256xf32>, vector<8x256xf32> -> vector<72x256xf32>
    %c0_26 = arith.constant 0 : index
    %c0_27 = arith.constant 0 : index
    %112 = vector.load %arg3[%c0_26, %c0_27] : memref<4x72xf32, #tpu.memory_space<vmem>>, vector<4x72xf32>
    %cst_28 = arith.constant dense<0.000000e+00> : vector<4x256xf32>
    %113 = tpu.matmul %112, %111, %cst_28 {dimension_numbers = #tpu.dot_dimension_numbers<[1], [0], [0], [1], [0, 0, 1, 1], [], []>} : vector<4x72xf32>, vector<72x256xf32>, vector<4x256xf32> -> vector<4x256xf32>
    %c0_29 = arith.constant 0 : index
    %c0_30 = arith.constant 0 : index
    %114 = vector.load %arg5[%c0_29, %c0_30] : memref<4x1xf32, #tpu.memory_space<vmem>>, vector<4x1xf32>
    %115 = vector.broadcast %114 : vector<4x1xf32> to vector<4x256xf32>
    %116 = arith.addf %113, %115 : vector<4x256xf32>
    %cst_31 = arith.constant 0.000000e+00 : f32
    %117 = vector.broadcast %cst_31 : f32 to vector<4x256xf32>
    %118 = arith.maximumf %116, %117 : vector<4x256xf32>
    %c0_32 = arith.constant 0 : index
    %c0_33 = arith.constant 0 : index
    %c0_34 = arith.constant 0 : index
    %119 = vector.load %arg7[%c0_32, %c0_33, %c0_34] : memref<1x4x256xf32, #tpu.memory_space<vmem>>, vector<1x4x256xf32>
    %120 = vector.shape_cast %119 : vector<1x4x256xf32> to vector<4x256xf32>
    %121 = vector.shape_cast %118 : vector<4x256xf32> to vector<1x4x256xf32>
    tpu.vector_store %arg7[%c0_32, %c0_33, %c0_34], %121 {strides = array<i32>} : memref<1x4x256xf32, #tpu.memory_space<vmem>>, vector<1x4x256xf32>,
    return
  }
  func.func @transform_0(%arg0: i32) -> (i32, i32, i32) {
    %c0_i32 = arith.constant 0 : i32
    %c0_i32_0 = arith.constant 0 : i32
    %c0_i32_1 = arith.constant 0 : i32
    return %arg0, %c0_i32, %c0_i32_0 : i32, i32, i32
  }
  func.func @transform_1(%arg0: i32) -> (i32, i32) {
    %c0_i32 = arith.constant 0 : i32
    %c0_i32_0 = arith.constant 0 : i32
    %c0_i32_1 = arith.constant 0 : i32
    return %c0_i32, %c0_i32_0 : i32, i32
  }
  func.func @transform_2(%arg0: i32) -> (i32, i32) {
    %c0_i32 = arith.constant 0 : i32
    %c0_i32_0 = arith.constant 0 : i32
    %c0_i32_1 = arith.constant 0 : i32
    return %c0_i32, %c0_i32_0 : i32, i32
  }
  func.func @transform_3(%arg0: i32) -> (i32, i32) {
    %c0_i32 = arith.constant 0 : i32
    %c0_i32_0 = arith.constant 0 : i32
    %c0_i32_1 = arith.constant 0 : i32
    return %c0_i32, %c0_i32_0 : i32, i32
  }
  func.func @transform_4(%arg0: i32) -> (i32, i32) {
    %c0_i32 = arith.constant 0 : i32
    %c0_i32_0 = arith.constant 0 : i32
    %c0_i32_1 = arith.constant 0 : i32
    return %c0_i32, %c0_i32_0 : i32, i32
  }
  func.func @transform_5(%arg0: i32) -> (i32, i32, i32) {
    %c0_i32 = arith.constant 0 : i32
    %c0_i32_0 = arith.constant 0 : i32
    %c0_i32_1 = arith.constant 0 : i32
    return %arg0, %c0_i32, %c0_i32_0 : i32, i32, i32
  }
  func.func @transform_6(%arg0: i32) -> (i32, i32, i32) {
    %c0_i32 = arith.constant 0 : i32
    %c0_i32_0 = arith.constant 0 : i32
    %c0_i32_1 = arith.constant 0 : i32
    return %arg0, %c0_i32, %c0_i32_0 : i32, i32, i32
  }
}

</mosaic_0001>

<llo_original>
// kernel: first_octave_cbr.1
$region0: #{first_octave_cbr.1}
  #allocation0 [shape = 'u32[]', space=smem, size = 0x4, offset = 0x4, fixed_abs, tag = 'smem constant byte address 0x4 - core index']
  #allocation1 [shape = 'u32[144,128]{1,0:T(1,128)}', space=vmem, size = 0x12000, scoped, tag = 'internal scratch']
  %s0 = inlined_call_operand.vmem [shape: f32[2,8,368], index: 0, kind: input, shape index: {}]
  %s1 = inlined_call_operand.vmem [shape: f32[4,72], index: 1, kind: input, shape index: {}]
  %s2 = inlined_call_operand.vmem [shape: f32[4,72], index: 2, kind: input, shape index: {}]
  %s3 = inlined_call_operand.vmem [shape: f32[4,1], index: 3, kind: input, shape index: {}]
  %s4 = inlined_call_operand.vmem [shape: f32[4,1], index: 4, kind: input, shape index: {}]
  %s5 = inlined_call_operand.vmem [shape: f32[2,4,256], index: 5, kind: output, shape index: {0}]
  %s6 = inlined_call_operand.vmem [shape: f32[2,4,256], index: 6, kind: output, shape index: {1}]
  %7 = xla_tuple %s5, %s6
  %s8 = sld [smem:[#allocation0]]
  $region61: #{first_octave_cbr.1} parent=0
    _
  %s10 = ssub.s32 1, %s8
  %s11 = scalar_select 0, %s10, %s8
  loop: start=0, step=1, limit=4
  $region2: #{first_octave_cbr.1} parent=0 // loop_pre_header
    _
  $region3: #{first_octave_cbr.1} parent=0 // loop_header
    %s13 = sphi 0, %s17
    %p14 = scmp.ge.s32.totalorder %s13, 4
    %s23 = sphi 0, %s25
    %s26 = sphi 0, %s23
    %s27 = sphi 0, %s26
    %s43 = sphi 0, %s27
    %s47 = sphi 0, %s47
    %s49 = sphi 0, %s47
    %s50 = sphi 0, %s49
    %s64 = sphi 0, %s50
    %s68 = sphi 0, %s68
    %s70 = sphi 0, %s68
    %s71 = sphi 0, %s70
    %s85 = sphi 0, %s71
    %s89 = sphi 0, %s89
    %s91 = sphi 0, %s89
    %s92 = sphi 0, %s91
    %s106 = sphi 0, %s92
    %s110 = sphi 0, %s110
    %s112 = sphi 0, %s110
    %s113 = sphi 0, %s112
    %s127 = sphi 0, %s113
    %s133 = sphi 0, %s135
    %s136 = sphi 0, %s133
    %s137 = sphi 0, %s136
    %s153 = sphi 0, %s137
    %s159 = sphi 0, %s161
    %s162 = sphi 0, %s159
    %s163 = sphi 0, %s162
    %s179 = sphi 0, %s163
  $region4: #{first_octave_cbr.1} parent=0 // loop_header_branch
    %16 = sbr.rel (%p14) target = $region8
  $region5: #{first_octave_cbr.1} parent=0 // loop_body
    %s18 = ssub.s32 %s13, 1
    %s19 = ssub.s32 %s13, 2
    %s20 = sadd.s32 %s13, 1
    %s21 = ssub.s32 %s13, %s20
    %p22 = scmp.eq.s32.totalorder %s21, 0
    %s24 = sadd.s32 %s23, 1
    %s25 = scalar_select %p22, %s23, %s24
    %p28 = pneg %p22
    %p29 = scmp.eq.s32.totalorder %s13, 1
    %p30 = por %p28, %p29
    %p31 = scmp.ne.s32.totalorder %s23, %s26
    %p32 = scmp.eq.s32.totalorder %s13, 0
    %p33 = por %p31, %p32
    %p34 = scmp.ne.s32.totalorder %s23, %s26
    %p35 = scmp.eq.s32.totalorder %s18, 1
    %p36 = por %p34, %p35
    %p37 = scmp.ne.s32.totalorder %s26, %s27
    %p38 = scmp.eq.s32.totalorder %s18, 0
    %p39 = por %p37, %p38
    %p40 = scmp.ne.s32.totalorder %s26, %s27
    %p41 = scmp.eq.s32.totalorder %s19, 1
    %p42 = por %p40, %p41
    %p44 = scmp.ne.s32.totalorder %s27, %s43
    %p45 = scmp.eq.s32.totalorder %s19, 0
    %p46 = por %p44, %p45
    %s48 = sadd.s32 %s47, 1
    %p51 = scmp.eq.s32.totalorder %s13, 1
    %p52 = scmp.ne.s32.totalorder %s47, %s49
    %p53 = scmp.eq.s32.totalorder %s13, 0
    %p54 = por %p52, %p53
    %p55 = scmp.ne.s32.totalorder %s47, %s49
    %p56 = scmp.eq.s32.totalorder %s18, 1
    %p57 = por %p55, %p56
    %p58 = scmp.ne.s32.totalorder %s49, %s50
    %p59 = scmp.eq.s32.totalorder %s18, 0
    %p60 = por %p58, %p59
    %p61 = scmp.ne.s32.totalorder %s49, %s50
    %p62 = scmp.eq.s32.totalorder %s19, 1
    %p63 = por %p61, %p62
    %p65 = scmp.ne.s32.totalorder %s50, %s64
    %p66 = scmp.eq.s32.totalorder %s19, 0
    %p67 = por %p65, %p66
    %s69 = sadd.s32 %s68, 1
    %p72 = scmp.eq.s32.totalorder %s13, 1
    %p73 = scmp.ne.s32.totalorder %s68, %s70
    %p74 = scmp.eq.s32.totalorder %s13, 0
    %p75 = por %p73, %p74
    %p76 = scmp.ne.s32.totalorder %s68, %s70
    %p77 = scmp.eq.s32.totalorder %s18, 1
    %p78 = por %p76, %p77
    %p79 = scmp.ne.s32.totalorder %s70, %s71
    %p80 = scmp.eq.s32.totalorder %s18, 0
    %p81 = por %p79, %p80
    %p82 = scmp.ne.s32.totalorder %s70, %s71
    %p83 = scmp.eq.s32.totalorder %s19, 1
    %p84 = por %p82, %p83
    %p86 = scmp.ne.s32.totalorder %s71, %s85
    %p87 = scmp.eq.s32.totalorder %s19, 0
    %p88 = por %p86, %p87
    %s90 = sadd.s32 %s89, 1
    %p93 = scmp.eq.s32.totalorder %s13, 1
    %p94 = scmp.ne.s32.totalorder %s89, %s91
    %p95 = scmp.eq.s32.totalorder %s13, 0
    %p96 = por %p94, %p95
    %p97 = scmp.ne.s32.totalorder %s89, %s91
    %p98 = scmp.eq.s32.totalorder %s18, 1
    %p99 = por %p97, %p98
    %p100 = scmp.ne.s32.totalorder %s91, %s92
    %p101 = scmp.eq.s32.totalorder %s18, 0
    %p102 = por %p100, %p101
    %p103 = scmp.ne.s32.totalorder %s91, %s92
    %p104 = scmp.eq.s32.totalorder %s19, 1
    %p105 = por %p103, %p104
    %p107 = scmp.ne.s32.totalorder %s92, %s106
    %p108 = scmp.eq.s32.totalorder %s19, 0
    %p109 = por %p107, %p108
    %s111 = sadd.s32 %s110, 1
    %p114 = scmp.eq.s32.totalorder %s13, 1
    %p115 = scmp.ne.s32.totalorder %s110, %s112
    %p116 = scmp.eq.s32.totalorder %s13, 0
    %p117 = por %p115, %p116
    %p118 = scmp.ne.s32.totalorder %s110, %s112
    %p119 = scmp.eq.s32.totalorder %s18, 1
    %p120 = por %p118, %p119
    %p121 = scmp.ne.s32.totalorder %s112, %s113
    %p122 = scmp.eq.s32.totalorder %s18, 0
    %p123 = por %p121, %p122
    %p124 = scmp.ne.s32.totalorder %s112, %s113
    %p125 = scmp.eq.s32.totalorder %s19, 1
    %p126 = por %p124, %p125
    %p128 = scmp.ne.s32.totalorder %s113, %s127
    %p129 = scmp.eq.s32.totalorder %s19, 0
    %p130 = por %p128, %p129
    %s131 = ssub.s32 %s13, %s20
    %p132 = scmp.eq.s32.totalorder %s131, 0
    %s134 = sadd.s32 %s133, 1
    %s135 = scalar_select %p132, %s133, %s134
    %p138 = pneg %p132
    %p139 = scmp.eq.s32.totalorder %s13, 1
    %p140 = por %p138, %p139
    %p141 = scmp.ne.s32.totalorder %s133, %s136
    %p142 = scmp.eq.s32.totalorder %s13, 0
    %p143 = por %p141, %p142
    %p144 = scmp.ne.s32.totalorder %s133, %s136
    %p145 = scmp.eq.s32.totalorder %s18, 1
    %p146 = por %p144, %p145
    %p147 = scmp.ne.s32.totalorder %s136, %s137
    %p148 = scmp.eq.s32.totalorder %s18, 0
    %p149 = por %p147, %p148
    %p150 = scmp.ne.s32.totalorder %s136, %s137
    %p151 = scmp.eq.s32.totalorder %s19, 1
    %p152 = por %p150, %p151
    %p154 = scmp.ne.s32.totalorder %s137, %s153
    %p155 = scmp.eq.s32.totalorder %s19, 0
    %p156 = por %p154, %p155
    %s157 = ssub.s32 %s13, %s20
    %p158 = scmp.eq.s32.totalorder %s157, 0
    %s160 = sadd.s32 %s159, 1
    %s161 = scalar_select %p158, %s159, %s160
    %p164 = pneg %p158
    %p165 = scmp.eq.s32.totalorder %s13, 1
    %p166 = por %p164, %p165
    %p167 = scmp.ne.s32.totalorder %s159, %s162
    %p168 = scmp.eq.s32.totalorder %s13, 0
    %p169 = por %p167, %p168
    %p170 = scmp.ne.s32.totalorder %s159, %s162
    %p171 = scmp.eq.s32.totalorder %s18, 1
    %p172 = por %p170, %p171
    %p173 = scmp.ne.s32.totalorder %s162, %s163
    %p174 = scmp.eq.s32.totalorder %s18, 0
    %p175 = por %p173, %p174
    %p176 = scmp.ne.s32.totalorder %s162, %s163
    %p177 = scmp.eq.s32.totalorder %s19, 1
    %p178 = por %p176, %p177
    %p180 = scmp.ne.s32.totalorder %s163, %s179
    %p181 = scmp.eq.s32.totalorder %s19, 0
    %p182 = por %p180, %p181
    %p183 = scmp.le.s32.totalorder 1, %s13
    %p184 = scmp.lt.s32.totalorder %s13, 3
    %p185 = pnand %p183, %p184
    %p186 = pneg %p185
    // Predicated region
    $region9: #{first_octave_cbr.1} parent=5 // pred_check
      _
    $region10: #{first_octave_cbr.1} parent=5 // pred_check_branch
      %188 = sbr.rel (%p185) target = $region12
    $region11: #{first_octave_cbr.1} parent=5 // pred_region
      %s189 = ssub.s32 %s13, 1
      // Predicated region
      $region13: #{first_octave_cbr.1} parent=11 // pred_check
        %p190 = pneg %p60
      $region14: #{first_octave_cbr.1} parent=11 // pred_check_branch
        %192 = sbr.rel (%p190) target = $region16
      $region15: #{first_octave_cbr.1} parent=11 // pred_region
        _
      $region16: #{first_octave_cbr.1} parent=11 // pred_fallthru
        _
      // Predicated region
      $region17: #{first_octave_cbr.1} parent=11 // pred_check
        %p193 = pneg %p81
      $region18: #{first_octave_cbr.1} parent=11 // pred_check_branch
        %195 = sbr.rel (%p193) target = $region20
      $region19: #{first_octave_cbr.1} parent=11 // pred_region
        _
      $region20: #{first_octave_cbr.1} parent=11 // pred_fallthru
        _
      // Predicated region
      $region21: #{first_octave_cbr.1} parent=11 // pred_check
        %p196 = pneg %p102
      $region22: #{first_octave_cbr.1} parent=11 // pred_check_branch
        %198 = sbr.rel (%p196) target = $region24
      $region23: #{first_octave_cbr.1} parent=11 // pred_region
        _
      $region24: #{first_octave_cbr.1} parent=11 // pred_fallthru
        _
      // Predicated region
      $region25: #{first_octave_cbr.1} parent=11 // pred_check
        %p199 = pneg %p123
      $region26: #{first_octave_cbr.1} parent=11 // pred_check_branch
        %201 = sbr.rel (%p199) target = $region28
      $region27: #{first_octave_cbr.1} parent=11 // pred_region
        _
      $region28: #{first_octave_cbr.1} parent=11 // pred_fallthru
        _
    $region12: #{first_octave_cbr.1} parent=5 // pred_fallthru
      _
    %p202 = scmp.lt.s32.totalorder %s13, 2
    // Predicated region
    $region29: #{first_octave_cbr.1} parent=5 // pred_check
      %p203 = pneg %p202
    $region30: #{first_octave_cbr.1} parent=5 // pred_check_branch
      %205 = sbr.rel (%p203) target = $region32
    $region31: #{first_octave_cbr.1} parent=5 // pred_region
      // Predicated region
      $region33: #{first_octave_cbr.1} parent=31 // pred_check
        %p206 = pneg %p33
      $region34: #{first_octave_cbr.1} parent=31 // pred_check_branch
        %208 = sbr.rel (%p206) target = $region36
      $region35: #{first_octave_cbr.1} parent=31 // pred_region
        %p209 = scmp.lt.s32.totalorder %s13, 1
        %s210 = scalar_select %p209, %s13, 1
        %s211 = smul.addr %s210, 3
        %s212 = smul.addr %s211, 8
        %s213 = scalar_lea.vmem %s0, %s212
      $region36: #{first_octave_cbr.1} parent=31 // pred_fallthru
        _
    $region32: #{first_octave_cbr.1} parent=5 // pred_fallthru
      _
    %p214 = scmp.le.s32.totalorder 1, %s13
    %p215 = scmp.lt.s32.totalorder %s13, 3
    %p216 = pnand %p214, %p215
    %p217 = pneg %p216
    // Predicated region
    $region37: #{first_octave_cbr.1} parent=5 // pred_check
      _
    $region38: #{first_octave_cbr.1} parent=5 // pred_check_branch
      %219 = sbr.rel (%p216) target = $region40
    $region39: #{first_octave_cbr.1} parent=5 // pred_region
      %s220 = ssub.s32 %s13, 1
      %p221 = scmp.lt.s32.totalorder %s18, 1
      %s222 = scalar_select %p221, %s18, 1
      %s223 = smul.addr %s222, 3
      %s224 = smul.addr %s223, 8
      %s225 = scalar_lea.vmem %s0, %s224
      %p226 = pneg %p39
      %p227 = pneg %p36
      %p228 = pneg %p60
      %p229 = pneg %p57
      %p230 = pneg %p81
      %p231 = pneg %p78
      %p232 = pneg %p102
      %p233 = pneg %p99
      %p234 = pneg %p123
      %p235 = pneg %p120
      %p236 = pneg %p149
      %p237 = pneg %p146
      %p238 = scmp.lt.s32.totalorder %s18, 1
      %s239 = scalar_select %p238, %s18, 1
      %s240 = smul.addr %s239, 2
      %s241 = smul.addr %s240, 4
      %s242 = scalar_lea.vmem %s5, %s241
      %p243 = pneg %p175
      %p244 = pneg %p172
      %p245 = scmp.lt.s32.totalorder %s18, 1
      %s246 = scalar_select %p245, %s18, 1
      %s247 = smul.addr %s246, 2
      %s248 = smul.addr %s247, 4
      %s249 = scalar_lea.vmem %s6, %s248
      %p250 = scmp.lt.s32.totalorder %s18, 1
      %s251 = scalar_select %p250, %s18, 1
      %s252 = smul.addr %s251, 3
      %s253 = smul.addr %s252, 8
      %s254 = scalar_lea.vmem %s0, %s253
      %p255 = scmp.lt.s32.totalorder %s18, 1
      %s256 = scalar_select %p255, %s18, 1
      %s257 = smul.addr %s256, 2
      %s258 = smul.addr %s257, 4
      %s259 = scalar_lea.vmem %s5, %s258
      %p260 = scmp.lt.s32.totalorder %s18, 1
      %s261 = scalar_select %p260, %s18, 1
      %s262 = smul.addr %s261, 2
      %s263 = smul.addr %s262, 4
      %s264 = scalar_lea.vmem %s6, %s263
      %v265 = vld [vmem:[%s254] sm:$0xff]
      %v266 = vld [vmem:[%s254 + $0x8] sm:$0xff]
      %v267 = vld [vmem:[%s254 + $0x10] sm:$0xff]
      %v268 = vlaneseq
      %v269 = vand.u32 %v268, 127
      %v270 = vadd.s32 %v269, 128
      %vm271 = vcmp.lt.s32.totalorder %v269, 0
      %v272 = vsub.s32 0, %v269
      %v273 = vsel %vm271, %v272, %v269
      %v274 = vshrl.u32 %v273, 4
      %v275 = vand.u32 %v273, 15
      %v276 = vsub.s32 0, %v275
      %v277 = vsel %vm271, %v276, %v275
      %vm278 = vcmp.lt.s32.totalorder %v270, 0
      %v279 = vsub.s32 0, %v270
      %v280 = vsel %vm278, %v279, %v270
      %v281 = vshrl.u32 %v280, 4
      %v282 = vand.u32 %v280, 15
      %v283 = vsub.s32 0, %v282
      %v284 = vsel %vm278, %v283, %v282
      %vm285 = vcmp.ne.s32.totalorder %v277, 0
      %vm286 = vcmp.ne.s32.totalorder %v284, 0
      %vm287 = vcmp.lt.s32.totalorder %v277, 0
      %vm288 = vcmp.lt.s32.totalorder %v284, 0
      %vm289 = vmand %vm287, %vm285
      %vm290 = vmand %vm288, %vm286
      %v291 = vadd.s32 %v277, 16
      %v292 = vadd.s32 %v284, 16
      %v293 = vsel %vm289, %v291, %v277
      %v294 = vsel %vm290, %v292, %v284
      %vm295 = vcmp.ge.s32.totalorder %v293, 1
      %vm296 = vcmp.ge.s32.totalorder %v294, 1
      %vm297 = vcmp.lt.s32.totalorder %v293, 15
      %vm298 = vcmp.lt.s32.totalorder %v294, 15
      %vm299 = vcmp.ge.s32.totalorder %v293, 2
      %vm300 = vcmp.ge.s32.totalorder %v294, 2
      %vm301 = vcmp.lt.s32.totalorder %v293, 14
      %vm302 = vcmp.lt.s32.totalorder %v294, 14
      %v303 = vsel %vm295, 1, 0
      %v304 = vsel %vm296, 1, 0
      %vm305 = vcmp.eq.s32.totalorder %v303, 1
      %vm306 = vcmp.eq.s32.totalorder %v304, 1
      %310 = vrot.lane.b32.xlu0 %v265, 89
      %v311 = vpop.permute.xlu0 %310
      %312 = vrot.lane.b32.xlu0 %v266, 89
      %v313 = vpop.permute.xlu0 %312
      %314 = vrot.lane.b32.xlu0 %v267, 89
      %v315 = vpop.permute.xlu0 %314
      %vm316 = vcmask 728064
      %v317 = vsel %vm316, %v311, %v313
      %v318 = vsel %vm316, %v313, %v315
      %v321 = vsel %vm305, %v317, 0.0
      %v322 = vsel %vm306, %v318, 0.0
      %v323 = vsel %vm297, 1, 0
      %v324 = vsel %vm298, 1, 0
      %vm325 = vcmp.eq.s32.totalorder %v323, 1
      %vm326 = vcmp.eq.s32.totalorder %v324, 1
      %327 = vrot.lane.b32.xlu0 %v265, 87
      %v328 = vpop.permute.xlu0 %327
      %329 = vrot.lane.b32.xlu0 %v266, 87
      %v330 = vpop.permute.xlu0 %329
      %331 = vrot.lane.b32.xlu0 %v267, 87
      %v332 = vpop.permute.xlu0 %331
      %vm333 = vcmask 711680
      %v334 = vsel %vm333, %v328, %v330
      %v335 = vsel %vm333, %v330, %v332
      %v338 = vsel %vm325, %v334, 0.0
      %v339 = vsel %vm326, %v335, 0.0
      %340 = vrot.lane.b32.xlu0 %v265, 73
      %v341 = vpop.permute.xlu0 %340
      %342 = vrot.lane.b32.xlu0 %v266, 73
      %v343 = vpop.permute.xlu0 %342
      %344 = vrot.lane.b32.xlu0 %v267, 73
      %v345 = vpop.permute.xlu0 %344
      %vm346 = vcmask 596992
      %v347 = vsel %vm346, %v341, %v343
      %v348 = vsel %vm346, %v343, %v345
      %v351 = vsel %vm305, %v347, 0.0
      %v352 = vsel %vm306, %v348, 0.0
      %353 = vrot.lane.b32.xlu0 %v265, 71
      %v354 = vpop.permute.xlu0 %353
      %355 = vrot.lane.b32.xlu0 %v266, 71
      %v356 = vpop.permute.xlu0 %355
      %357 = vrot.lane.b32.xlu0 %v267, 71
      %v358 = vpop.permute.xlu0 %357
      %vm359 = vcmask 580608
      %v360 = vsel %vm359, %v354, %v356
      %v361 = vsel %vm359, %v356, %v358
      %v364 = vsel %vm325, %v360, 0.0
      %v365 = vsel %vm326, %v361, 0.0
      %366 = vrot.lane.b32.xlu0 %v265, 57
      %v367 = vpop.permute.xlu0 %366
      %368 = vrot.lane.b32.xlu0 %v266, 57
      %v369 = vpop.permute.xlu0 %368
      %370 = vrot.lane.b32.xlu0 %v267, 57
      %v371 = vpop.permute.xlu0 %370
      %vm372 = vcmask 465920
      %v373 = vsel %vm372, %v367, %v369
      %v374 = vsel %vm372, %v369, %v371
      %v377 = vsel %vm305, %v373, 0.0
      %v378 = vsel %vm306, %v374, 0.0
      %379 = vrot.lane.b32.xlu0 %v265, 55
      %v380 = vpop.permute.xlu0 %379
      %381 = vrot.lane.b32.xlu0 %v266, 55
      %v382 = vpop.permute.xlu0 %381
      %383 = vrot.lane.b32.xlu0 %v267, 55
      %v384 = vpop.permute.xlu0 %383
      %vm385 = vcmask 449536
      %v386 = vsel %vm385, %v380, %v382
      %v387 = vsel %vm385, %v382, %v384
      %v390 = vsel %vm325, %v386, 0.0
      %v391 = vsel %vm326, %v387, 0.0
      %392 = vrot.lane.b32.xlu0 %v265, 88
      %v393 = vpop.permute.xlu0 %392
      %394 = vrot.lane.b32.xlu0 %v266, 88
      %v395 = vpop.permute.xlu0 %394
      %396 = vrot.lane.b32.xlu0 %v267, 88
      %v397 = vpop.permute.xlu0 %396
      %vm398 = vcmask 719872
      %v399 = vsel %vm398, %v393, %v395
      %v400 = vsel %vm398, %v395, %v397
      %403 = vrot.lane.b32.xlu0 %v265, 72
      %v404 = vpop.permute.xlu0 %403
      %405 = vrot.lane.b32.xlu0 %v266, 72
      %v406 = vpop.permute.xlu0 %405
      %407 = vrot.lane.b32.xlu0 %v267, 72
      %v408 = vpop.permute.xlu0 %407
      %vm409 = vcmask 588800
      %v410 = vsel %vm409, %v404, %v406
      %v411 = vsel %vm409, %v406, %v408
      %414 = vrot.lane.b32.xlu0 %v265, 56
      %v415 = vpop.permute.xlu0 %414
      %416 = vrot.lane.b32.xlu0 %v266, 56
      %v417 = vpop.permute.xlu0 %416
      %418 = vrot.lane.b32.xlu0 %v267, 56
      %v419 = vpop.permute.xlu0 %418
      %vm420 = vcmask 457728
      %v421 = vsel %vm420, %v415, %v417
      %v422 = vsel %vm420, %v417, %v419
      %v425 = vld [vmem:[%s1] sm:$0xf]
      %v426 = vld [vmem:[%s3] sm:$0xf]
      %428 = vset.pattern.permute.xlu0 0
      %429 = vperm.xlu0 %428, %v426
      %v430 = vpop.permute.xlu0 %429
      %v433 = vsel %vm409, %v425, 0
      %435 = vmatprep.subr.mxu0 %v322
      %436 = vmatpush1.msra.mxu0 %v321
      %437 = vmatprep.subr.mxu0 %v400
      %438 = vmatpush1.msra.mxu0 %v399
      %439 = vmatprep.subr.mxu0 %v339
      %440 = vmatpush1.msra.mxu0 %v338
      %441 = vmatprep.subr.mxu0 %v352
      %442 = vmatpush1.msra.mxu0 %v351
      %443 = vmatprep.subr.mxu0 %v411
      %444 = vmatpush1.msra.mxu0 %v410
      %445 = vmatprep.subr.mxu0 %v365
      %446 = vmatpush1.msra.mxu0 %v364
      %447 = vmatprep.subr.mxu0 %v378
      %448 = vmatpush1.msra.mxu0 %v377
      %449 = vmatprep.subr.mxu0 %v422
      %450 = vmatpush1.msra.mxu0 %v421
      %451 = vmatprep.subr.mxu0 %v391
      %452 = vmatpush1.msra.mxu0 %v390
      %453 = vmatprep.subr.mxu0 0.0
      %454 = vmatpush1.msra.mxu0 0.0
      %455 = vmatprep.subr.mxu0 0.0
      %456 = vmatpush1.msra.mxu0 0.0
      %457 = vmatprep.subr.mxu0 0.0
      %458 = vmatpush1.msra.mxu0 0.0
      %459 = vmatprep.subr.mxu0 0.0
      %460 = vmatpush1.msra.mxu0 0.0
      %461 = vmatprep.subr.mxu0 0.0
      %462 = vmatpush1.msra.mxu0 0.0
      %463 = vmatprep.subr.mxu0 0.0
      %464 = vmatpush1.msra.mxu0 0.0
      %465 = vmatprep.subr.mxu0 0.0
      %466 = vmatpush1.msra.mxu0 0.0
      %467 = vmatprep.subr.mxu0 0.0
      %468 = vmatpush1.msra.mxu0 0.0
      %469 = vmatprep.subr.mxu0 0.0
      %470 = vmatpush1.msra.mxu0 0.0
      %471 = vmatprep.subr.mxu0 0.0
      %472 = vmatpush1.msra.mxu0 0.0
      %473 = vmatprep.subr.mxu0 0.0
      %474 = vmatpush1.msra.mxu0 0.0
      %475 = vmatprep.subr.mxu0 0.0
      %476 = vmatpush1.msra.mxu0 0.0
      %477 = vmatprep.subr.mxu0 0.0
      %478 = vmatpush1.msra.mxu0 0.0
      %479 = vmatprep.subr.mxu0 0.0
      %480 = vmatpush1.msra.mxu0 0.0
      %481 = vmatprep.subr.mxu0 0.0
      %482 = vmatpush1.msra.mxu0 0.0
      %483 = vmatprep.subr.mxu0 0.0
      %484 = vmatpush1.msra.mxu0 0.0
      %485 = vmatprep.subr.mxu0 0.0
      %486 = vmatpush1.msra.mxu0 0.0
      %487 = vmatprep.subr.mxu0 0.0
      %488 = vmatpush1.msra.mxu0 0.0
      %489 = vmatprep.subr.mxu0 0.0
      %490 = vmatpush1.msra.mxu0 0.0
      %491 = vmatprep.subr.mxu0 0.0
      %492 = vmatpush1.msra.mxu0 0.0
      %493 = vmatprep.subr.mxu0 0.0
      %494 = vmatpush1.msra.mxu0 0.0
      %495 = vmatprep.subr.mxu0 0.0
      %496 = vmatpush1.msra.mxu0 0.0
      %497 = vmatprep.subr.mxu0 0.0
      %498 = vmatpush1.msra.mxu0 0.0
      %499 = vmatprep.mubr.f32.mxu0 0.0
      %500 = vmatmul.mubr.f32.gmra.mrb[0].mxu0 %v433
      %v501 = vpop.f32.mrb[0].mxu0
      %v502 = vadd.f32 %v430, %v501
      %v503 = vpop.f32.mrb[0].mxu0
      %v504 = vadd.f32 %v430, %v503
      %505 = vdwg.mxu0
      %v506 = vmax.f32 %v502, 0.0
      %v507 = vmax.f32 %v504, 0.0
      %v510 = vcombine.low %v506, %v507
      %512 = vst [vmem:[%s259] sm:$0xff] %v510
      %513 = vrot.lane.b32.xlu0 %v265, 127
      %v514 = vpop.permute.xlu0 %513
      %515 = vrot.lane.b32.xlu0 %v266, 127
      %v516 = vpop.permute.xlu0 %515
      %517 = vrot.lane.b32.xlu0 %v267, 127
      %v518 = vpop.permute.xlu0 %517
      %vm519 = vcmask 1039360
      %v520 = vsel %vm519, %v514, %v516
      %v521 = vsel %vm519, %v516, %v518
      %v525 = vadd.f32 %v265, %v520
      %v526 = vadd.f32 %v266, %v521
      %v527 = vadd.f32 %v267, %v518
      %528 = vrot.lane.b32.xlu0 %v265, 112
      %v529 = vpop.permute.xlu0 %528
      %530 = vrot.lane.b32.xlu0 %v266, 112
      %v531 = vpop.permute.xlu0 %530
      %532 = vrot.lane.b32.xlu0 %v267, 112
      %v533 = vpop.permute.xlu0 %532
      %vm534 = vcmask 916480
      %v535 = vsel %vm534, %v529, %v531
      %v536 = vsel %vm534, %v531, %v533
      %v540 = vadd.f32 %v525, %v535
      %v541 = vadd.f32 %v526, %v536
      %v542 = vadd.f32 %v527, %v533
      %543 = vrot.lane.b32.xlu0 %v265, 111
      %v544 = vpop.permute.xlu0 %543
      %545 = vrot.lane.b32.xlu0 %v266, 111
      %v546 = vpop.permute.xlu0 %545
      %547 = vrot.lane.b32.xlu0 %v267, 111
      %v548 = vpop.permute.xlu0 %547
      %vm549 = vcmask 908288
      %v550 = vsel %vm549, %v544, %v546
      %v551 = vsel %vm549, %v546, %v548
      %v555 = vadd.f32 %v540, %v550
      %v556 = vadd.f32 %v541, %v551
      %v557 = vadd.f32 %v542, %v548
      %v558 = vsel %vm299, 1, 0
      %v559 = vsel %vm300, 1, 0
      %vm560 = vcmp.eq.s32.totalorder %v558, 1
      %vm561 = vcmp.eq.s32.totalorder %v559, 1
      %565 = vrot.lane.b32.xlu0 %v555, 106
      %v566 = vpop.permute.xlu0 %565
      %567 = vrot.lane.b32.xlu0 %v556, 106
      %v568 = vpop.permute.xlu0 %567
      %569 = vrot.lane.b32.xlu0 %v557, 106
      %v570 = vpop.permute.xlu0 %569
      %vm571 = vcmask 867328
      %v572 = vsel %vm571, %v566, %v568
      %v573 = vsel %vm571, %v568, %v570
      %v576 = vsel %vm560, %v572, 0.0
      %v577 = vsel %vm561, %v573, 0.0
      %v578 = vsel %vm301, 1, 0
      %v579 = vsel %vm302, 1, 0
      %vm580 = vcmp.eq.s32.totalorder %v578, 1
      %vm581 = vcmp.eq.s32.totalorder %v579, 1
      %582 = vrot.lane.b32.xlu0 %v555, 102
      %v583 = vpop.permute.xlu0 %582
      %584 = vrot.lane.b32.xlu0 %v556, 102
      %v585 = vpop.permute.xlu0 %584
      %586 = vrot.lane.b32.xlu0 %v557, 102
      %v587 = vpop.permute.xlu0 %586
      %vm588 = vcmask 834560
      %v589 = vsel %vm588, %v583, %v585
      %v590 = vsel %vm588, %v585, %v587
      %v593 = vsel %vm580, %v589, 0.0
      %v594 = vsel %vm581, %v590, 0.0
      %595 = vrot.lane.b32.xlu0 %v555, 74
      %v596 = vpop.permute.xlu0 %595
      %597 = vrot.lane.b32.xlu0 %v556, 74
      %v598 = vpop.permute.xlu0 %597
      %599 = vrot.lane.b32.xlu0 %v557, 74
      %v600 = vpop.permute.xlu0 %599
      %vm601 = vcmask 605184
      %v602 = vsel %vm601, %v596, %v598
      %v603 = vsel %vm601, %v598, %v600
      %v606 = vsel %vm560, %v602, 0.0
      %v607 = vsel %vm561, %v603, 0.0
      %608 = vrot.lane.b32.xlu0 %v555, 70
      %v609 = vpop.permute.xlu0 %608
      %610 = vrot.lane.b32.xlu0 %v556, 70
      %v611 = vpop.permute.xlu0 %610
      %612 = vrot.lane.b32.xlu0 %v557, 70
      %v613 = vpop.permute.xlu0 %612
      %vm614 = vcmask 572416
      %v615 = vsel %vm614, %v609, %v611
      %v616 = vsel %vm614, %v611, %v613
      %v619 = vsel %vm580, %v615, 0.0
      %v620 = vsel %vm581, %v616, 0.0
      %621 = vrot.lane.b32.xlu0 %v555, 42
      %v622 = vpop.permute.xlu0 %621
      %623 = vrot.lane.b32.xlu0 %v556, 42
      %v624 = vpop.permute.xlu0 %623
      %625 = vrot.lane.b32.xlu0 %v557, 42
      %v626 = vpop.permute.xlu0 %625
      %vm627 = vcmask 343040
      %v628 = vsel %vm627, %v622, %v624
      %v629 = vsel %vm627, %v624, %v626
      %v632 = vsel %vm560, %v628, 0.0
      %v633 = vsel %vm561, %v629, 0.0
      %634 = vrot.lane.b32.xlu0 %v555, 38
      %v635 = vpop.permute.xlu0 %634
      %636 = vrot.lane.b32.xlu0 %v556, 38
      %v637 = vpop.permute.xlu0 %636
      %638 = vrot.lane.b32.xlu0 %v557, 38
      %v639 = vpop.permute.xlu0 %638
      %vm640 = vcmask 310272
      %v641 = vsel %vm640, %v635, %v637
      %v642 = vsel %vm640, %v637, %v639
      %v645 = vsel %vm580, %v641, 0.0
      %v646 = vsel %vm581, %v642, 0.0
      %647 = vrot.lane.b32.xlu0 %v555, 104
      %v648 = vpop.permute.xlu0 %647
      %649 = vrot.lane.b32.xlu0 %v556, 104
      %v650 = vpop.permute.xlu0 %649
      %651 = vrot.lane.b32.xlu0 %v557, 104
      %v652 = vpop.permute.xlu0 %651
      %vm653 = vcmask 850944
      %v654 = vsel %vm653, %v648, %v650
      %v655 = vsel %vm653, %v650, %v652
      %658 = vrot.lane.b32.xlu0 %v555, 72
      %v659 = vpop.permute.xlu0 %658
      %660 = vrot.lane.b32.xlu0 %v556, 72
      %v661 = vpop.permute.xlu0 %660
      %662 = vrot.lane.b32.xlu0 %v557, 72
      %v663 = vpop.permute.xlu0 %662
      %v664 = vsel %vm409, %v659, %v661
      %v665 = vsel %vm409, %v661, %v663
      %668 = vrot.lane.b32.xlu0 %v555, 40
      %v669 = vpop.permute.xlu0 %668
      %670 = vrot.lane.b32.xlu0 %v556, 40
      %v671 = vpop.permute.xlu0 %670
      %672 = vrot.lane.b32.xlu0 %v557, 40
      %v673 = vpop.permute.xlu0 %672
      %vm674 = vcmask 326656
      %v675 = vsel %vm674, %v669, %v671
      %v676 = vsel %vm674, %v671, %v673
      %v679 = vld [vmem:[%s2] sm:$0xf]
      %v680 = vld [vmem:[%s4] sm:$0xf]
      %682 = vset.pattern.permute.xlu0 0
      %683 = vperm.xlu0 %682, %v680
      %v684 = vpop.permute.xlu0 %683
      %v687 = vsel %vm409, %v679, 0
      %689 = vmatprep.subr.mxu0 %v577
      %690 = vmatpush1.msra.mxu0 %v576
      %691 = vmatprep.subr.mxu0 %v655
      %692 = vmatpush1.msra.mxu0 %v654
      %693 = vmatprep.subr.mxu0 %v594
      %694 = vmatpush1.msra.mxu0 %v593
      %695 = vmatprep.subr.mxu0 %v607
      %696 = vmatpush1.msra.mxu0 %v606
      %697 = vmatprep.subr.mxu0 %v665
      %698 = vmatpush1.msra.mxu0 %v664
      %699 = vmatprep.subr.mxu0 %v620
      %700 = vmatpush1.msra.mxu0 %v619
      %701 = vmatprep.subr.mxu0 %v633
      %702 = vmatpush1.msra.mxu0 %v632
      %703 = vmatprep.subr.mxu0 %v676
      %704 = vmatpush1.msra.mxu0 %v675
      %705 = vmatprep.subr.mxu0 %v646
      %706 = vmatpush1.msra.mxu0 %v645
      %707 = vmatprep.subr.mxu0 0.0
      %708 = vmatpush1.msra.mxu0 0.0
      %709 = vmatprep.subr.mxu0 0.0
      %710 = vmatpush1.msra.mxu0 0.0
      %711 = vmatprep.subr.mxu0 0.0
      %712 = vmatpush1.msra.mxu0 0.0
      %713 = vmatprep.subr.mxu0 0.0
      %714 = vmatpush1.msra.mxu0 0.0
      %715 = vmatprep.subr.mxu0 0.0
      %716 = vmatpush1.msra.mxu0 0.0
      %717 = vmatprep.subr.mxu0 0.0
      %718 = vmatpush1.msra.mxu0 0.0
      %719 = vmatprep.subr.mxu0 0.0
      %720 = vmatpush1.msra.mxu0 0.0
      %721 = vmatprep.subr.mxu0 0.0
      %722 = vmatpush1.msra.mxu0 0.0
      %723 = vmatprep.subr.mxu0 0.0
      %724 = vmatpush1.msra.mxu0 0.0
      %725 = vmatprep.subr.mxu0 0.0
      %726 = vmatpush1.msra.mxu0 0.0
      %727 = vmatprep.subr.mxu0 0.0
      %728 = vmatpush1.msra.mxu0 0.0
      %729 = vmatprep.subr.mxu0 0.0
      %730 = vmatpush1.msra.mxu0 0.0
      %731 = vmatprep.subr.mxu0 0.0
      %732 = vmatpush1.msra.mxu0 0.0
      %733 = vmatprep.subr.mxu0 0.0
      %734 = vmatpush1.msra.mxu0 0.0
      %735 = vmatprep.subr.mxu0 0.0
      %736 = vmatpush1.msra.mxu0 0.0
      %737 = vmatprep.subr.mxu0 0.0
      %738 = vmatpush1.msra.mxu0 0.0
      %739 = vmatprep.subr.mxu0 0.0
      %740 = vmatpush1.msra.mxu0 0.0
      %741 = vmatprep.subr.mxu0 0.0
      %742 = vmatpush1.msra.mxu0 0.0
      %743 = vmatprep.subr.mxu0 0.0
      %744 = vmatpush1.msra.mxu0 0.0
      %745 = vmatprep.subr.mxu0 0.0
      %746 = vmatpush1.msra.mxu0 0.0
      %747 = vmatprep.subr.mxu0 0.0
      %748 = vmatpush1.msra.mxu0 0.0
      %749 = vmatprep.subr.mxu0 0.0
      %750 = vmatpush1.msra.mxu0 0.0
      %751 = vmatprep.subr.mxu0 0.0
      %752 = vmatpush1.msra.mxu0 0.0
      %753 = vmatprep.mubr.f32.mxu0 0.0
      %754 = vmatmul.mubr.f32.gmra.mrb[0].mxu0 %v687
      %v755 = vpop.f32.mrb[0].mxu0
      %v756 = vadd.f32 %v684, %v755
      %v757 = vpop.f32.mrb[0].mxu0
      %v758 = vadd.f32 %v684, %v757
      %759 = vdwg.mxu0
      %v760 = vmax.f32 %v756, 0.0
      %v761 = vmax.f32 %v758, 0.0
      %v764 = vcombine.low %v760, %v761
      %766 = vst [vmem:[%s264] sm:$0xff] %v764
      %p767 = scmp.lt.s32.totalorder %s18, 1
      %s768 = scalar_select %p767, %s18, 1
      %s769 = smul.addr %s768, 2
      %s770 = smul.addr %s769, 4
      %s771 = scalar_lea.vmem %s5, %s770
      %p772 = scmp.lt.s32.totalorder %s18, 1
      %s773 = scalar_select %p772, %s18, 1
      %s774 = smul.addr %s773, 2
      %s775 = smul.addr %s774, 4
      %s776 = scalar_lea.vmem %s6, %s775
      // Predicated region
      $region41: #{first_octave_cbr.1} parent=39 // pred_check
        %p777 = pneg %p146
      $region42: #{first_octave_cbr.1} parent=39 // pred_check_branch
        %779 = sbr.rel (%p777) target = $region44
      $region43: #{first_octave_cbr.1} parent=39 // pred_region
        _
      $region44: #{first_octave_cbr.1} parent=39 // pred_fallthru
        _
      // Predicated region
      $region45: #{first_octave_cbr.1} parent=39 // pred_check
        %p780 = pneg %p172
      $region46: #{first_octave_cbr.1} parent=39 // pred_check_branch
        %782 = sbr.rel (%p780) target = $region48
      $region47: #{first_octave_cbr.1} parent=39 // pred_region
        _
      $region48: #{first_octave_cbr.1} parent=39 // pred_fallthru
        _
    $region40: #{first_octave_cbr.1} parent=5 // pred_fallthru
      _
    %p783 = scmp.le.s32.totalorder 2, %s13
    // Predicated region
    $region49: #{first_octave_cbr.1} parent=5 // pred_check
      %p784 = pneg %p783
    $region50: #{first_octave_cbr.1} parent=5 // pred_check_branch
      %786 = sbr.rel (%p784) target = $region52
    $region51: #{first_octave_cbr.1} parent=5 // pred_region
      %s787 = ssub.s32 %s13, 2
      // Predicated region
      $region53: #{first_octave_cbr.1} parent=51 // pred_check
        %p788 = pneg %p152
      $region54: #{first_octave_cbr.1} parent=51 // pred_check_branch
        %790 = sbr.rel (%p788) target = $region56
      $region55: #{first_octave_cbr.1} parent=51 // pred_region
        %p791 = scmp.lt.s32.totalorder %s19, 1
        %s792 = scalar_select %p791, %s19, 1
        %s793 = smul.addr %s792, 2
        %s794 = smul.addr %s793, 4
        %s795 = scalar_lea.vmem %s5, %s794
      $region56: #{first_octave_cbr.1} parent=51 // pred_fallthru
        _
      // Predicated region
      $region57: #{first_octave_cbr.1} parent=51 // pred_check
        %p796 = pneg %p178
      $region58: #{first_octave_cbr.1} parent=51 // pred_check_branch
        %798 = sbr.rel (%p796) target = $region60
      $region59: #{first_octave_cbr.1} parent=51 // pred_region
        %p799 = scmp.lt.s32.totalorder %s19, 1
        %s800 = scalar_select %p799, %s19, 1
        %s801 = smul.addr %s800, 2
        %s802 = smul.addr %s801, 4
        %s803 = scalar_lea.vmem %s6, %s802
      $region60: #{first_octave_cbr.1} parent=51 // pred_fallthru
        _
    $region52: #{first_octave_cbr.1} parent=5 // pred_fallthru
      _
  $region6: #{first_octave_cbr.1} parent=0 // loop_footer
    %s17 = sadd.s32 1, %s13
  $region7: #{first_octave_cbr.1} parent=0 // loop_footer_branch
    %12 = sbr.rel target = $region3
  $region8: #{first_octave_cbr.1} parent=0 // loop_exit
    _

</llo_original>
